<compile_context>
chip_gen: v6e
topology: v6e:2x2x1
jax: 0.10.0
libtpu: 0.0.40
codegen_flags: <defaults>
</compile_context>

<pallas_src>
import functools

import jax
import jax.numpy as jnp
from jax.experimental import pallas as pl
from jax.experimental.pallas import tpu as pltpu


def _normalizing_flow_kernel(b_ref, z_ref, w_ref, s_ref, zk_ref, lj_ref, *, L):
    """b_ref: SMEM (L,); z_ref: (TB, D); w_ref/s_ref: (L, D) VMEM;
    zk_ref: (TB, D); lj_ref: (L, TB)."""
    z = z_ref[...].astype(jnp.float32)                         # (TB, D)
    w_all = w_ref[...].astype(jnp.float32)                     # (L, D)
    s_all = s_ref[...].astype(jnp.float32)                     # (L, D)
    # <w_k, s_k> for all flows at once: one (L, D) multiply + lane reduce.
    ws_all = jnp.sum(w_all * s_all, axis=-1, keepdims=True)    # (L, 1)

    # L is small and static -> unrolled loop.
    # TODO(synk): switch to lax.fori_loop(..., unroll=True) if flow_length grows
    # large enough to pressure the 64-vreg file.
    for k in range(L):
        w = w_all[k:k + 1, :]                                  # (1, D)
        s = s_all[k:k + 1, :]                                  # (1, D)
        ws = ws_all[k:k + 1, :]                                # (1, 1)
        b = b_ref[k]                                           # scalar (SMEM)

        # activation = F.linear(z, w_k, b_k) -> (TB, 1); rank-1, keep on VPU+XLU.
        act = jnp.sum(z * w, axis=-1, keepdims=True) + b
        t = jnp.tanh(act)                                      # (TB, 1)

        # log|det grad| of THIS flow at the CURRENT z (factored identity).
        det_grad = 1.0 + (1.0 - t * t) * ws                    # (TB, 1)
        lj_ref[k, :] = jnp.log(jnp.abs(det_grad) + 1e-7)[:, 0]  # direct row store

        # planar flow transform.
        z = z + s * t                                          # (TB, D)

    zk_ref[...] = z.astype(zk_ref.dtype)


def _pick_batch_tile(B):
    """Batch tile: lane-dense (multiple of 128) for the (L, TB) lj block when
    possible, otherwise the full batch (full-dim blocks are always legal).
    Capped at 1024 rows so double-buffered blocks stay well inside v7x's
    64 MiB VMEM as well as v5e/v6e."""
    if B % 128 != 0:
        return B
    for tb in (1024, 512, 256, 128):
        if B % tb == 0:
            return tb
    return B


def normalizing_flow(z, weights, biases, scales, *, batch_tile=None):
    """z: (B, D); weights/scales: (L, D); biases: (L,).
    Returns (zk (B, D), log_jacobians (L, B, 1) float32)."""
    B, D = z.shape
    L = weights.shape[0]
    TB = batch_tile if batch_tile is not None else _pick_batch_tile(B)
    assert B % TB == 0, (B, TB)
    grid = (B // TB,)

    kernel = functools.partial(_normalizing_flow_kernel, L=L)
    zk, lj = pl.pallas_call(
        kernel,
        out_shape=(
            jax.ShapeDtypeStruct((B, D), z.dtype),
            jax.ShapeDtypeStruct((L, B), jnp.float32),
        ),
        grid_spec=pltpu.PrefetchScalarGridSpec(
            num_scalar_prefetch=1,                       # biases -> SMEM (L,)
            grid=grid,
            in_specs=[
                pl.BlockSpec((TB, D), lambda i, b: (i, 0)),   # z  (batch-tiled)
                pl.BlockSpec((L, D), lambda i, b: (0, 0)),    # weights (broadcast)
                pl.BlockSpec((L, D), lambda i, b: (0, 0)),    # scales  (broadcast)
            ],
            out_specs=(
                pl.BlockSpec((TB, D), lambda i, b: (i, 0)),   # zk
                pl.BlockSpec((L, TB), lambda i, b: (0, i)),   # log-jacobians
            ),
        ),
        compiler_params=pltpu.CompilerParams(
            dimension_semantics=("parallel",)),
    )(biases, z, weights, scales)

    # torch.stack of per-flow (B, 1) tensors -> (L, B, 1)
    return zk, lj[:, :, None]


def _reference(z, weights, biases, scales):
    """Pure-JAX reference mirroring the PyTorch module."""
    log_jacs = []
    for k in range(weights.shape[0]):
        w = weights[k:k + 1]                     # (1, D)
        s = scales[k:k + 1]                      # (1, D)
        b = biases[k]
        act = z @ w.T + b                        # (B, 1)
        t = jnp.tanh(act)
        psi = (1.0 - t ** 2) * w                 # (B, D)
        det_grad = 1.0 + psi @ s.T               # (B, 1)
        log_jacs.append(jnp.log(jnp.abs(det_grad) + 1e-7))
        z = z + s * t
    return z, jnp.stack(log_jacs)


def _run_case(key, B, D, L):
    kz, kw, kb, ks = jax.random.split(key, 4)
    z = jax.random.normal(kz, (B, D), dtype=jnp.float32)
    # deterministic "reset_parameters": uniform(-0.01, 0.01)
    weights = jax.random.uniform(kw, (L, D), minval=-0.01, maxval=0.01,
                                 dtype=jnp.float32)
    biases = jax.random.uniform(kb, (L,), minval=-0.01, maxval=0.01,
                                dtype=jnp.float32)
    scales = jax.random.uniform(ks, (L, D), minval=-0.01, maxval=0.01,
                                dtype=jnp.float32)

    zk, log_jacobians = jax.block_until_ready(
        normalizing_flow(z, weights, biases, scales))

    zk_ref, lj_ref = _reference(z, weights, biases, scales)
    assert zk.shape == (B, D) and log_jacobians.shape == (L, B, 1)
    assert jnp.allclose(zk, zk_ref, atol=1e-5, rtol=1e-5)
    assert jnp.allclose(log_jacobians, lj_ref, atol=1e-5, rtol=1e-5)


if __name__ == "__main__":
    key = jax.random.PRNGKey(0)
    k0, k1 = jax.random.split(key)

    # Small shape implied by the module (batch=2, dim=32, flow_length=4).
    _run_case(k0, B=2, D=32, L=4)
    # Lane-aligned batch exercising the batch grid (TB=1024, grid=(2,)).
    _run_case(k1, B=2048, D=32, L=4)

    print("KERNEL_OK")
</pallas_src>

<mosaic_0001>
module attributes {stable_mosaic.version = 11 : i64} {
  func.func @_normalizing_flow_kernel(%arg0: i32, %arg1: memref<4xf32, #tpu.memory_space<smem>>, %arg2: memref<2x32xf32, #tpu.memory_space<vmem>>, %arg3: memref<4x32xf32, #tpu.memory_space<vmem>>, %arg4: memref<4x32xf32, #tpu.memory_space<vmem>>, %arg5: memref<2x32xf32, #tpu.memory_space<vmem>>, %arg6: memref<4x2xf32, #tpu.memory_space<vmem>>) attributes {dimension_semantics = [#tpu.dimension_semantics<parallel>], iteration_bounds = array<i64: 1>, scalar_prefetch = 1 : i64, scratch_operands = 0 : i64, tpu.core_type = #tpu.core_type<tc>, window_params = [{transform_indices = @transform_0, window_bounds = array<i64: 2, 32>}, {pipeline_mode = #tpu.pipeline_mode<synchronous>, transform_indices = @transform_1, window_bounds = array<i64: 4, 32>}, {pipeline_mode = #tpu.pipeline_mode<synchronous>, transform_indices = @transform_2, window_bounds = array<i64: 4, 32>}, {transform_indices = @transform_3, window_bounds = array<i64: 2, 32>}, {transform_indices = @transform_4, window_bounds = array<i64: 4, 2>}]} {
    %c0 = arith.constant 0 : index
    %c0_0 = arith.constant 0 : index
    %0 = vector.load %arg2[%c0, %c0_0] : memref<2x32xf32, #tpu.memory_space<vmem>>, vector<2x32xf32>
    %c0_1 = arith.constant 0 : index
    %c0_2 = arith.constant 0 : index
    %1 = vector.load %arg3[%c0_1, %c0_2] : memref<4x32xf32, #tpu.memory_space<vmem>>, vector<4x32xf32>
    %c0_3 = arith.constant 0 : index
    %c0_4 = arith.constant 0 : index
    %2 = vector.load %arg4[%c0_3, %c0_4] : memref<4x32xf32, #tpu.memory_space<vmem>>, vector<4x32xf32>
    %3 = arith.mulf %1, %2 : vector<4x32xf32>
    %cst = arith.constant dense<0.000000e+00> : vector<4xf32>
    %4 = vector.multi_reduction <add>, %3, %cst [1] : vector<4x32xf32> to vector<4xf32>
    %5 = vector.shape_cast %4 : vector<4xf32> to vector<4x1xf32>
    %6 = vector.extract_strided_slice %1 {offsets = [0, 0], sizes = [1, 32], strides = [1, 1]} : vector<4x32xf32> to vector<1x32xf32>
    %7 = vector.extract_strided_slice %2 {offsets = [0, 0], sizes = [1, 32], strides = [1, 1]} : vector<4x32xf32> to vector<1x32xf32>
    %8 = vector.extract_strided_slice %5 {offsets = [0, 0], sizes = [1, 1], strides = [1, 1]} : vector<4x1xf32> to vector<1x1xf32>
    %c0_5 = arith.constant 0 : index
    %9 = memref.load %arg1[%c0_5] : memref<4xf32, #tpu.memory_space<smem>>
    %10 = vector.broadcast %6 : vector<1x32xf32> to vector<2x32xf32>
    %11 = arith.mulf %0, %10 : vector<2x32xf32>
    %cst_6 = arith.constant dense<0.000000e+00> : vector<2xf32>
    %12 = vector.multi_reduction <add>, %11, %cst_6 [1] : vector<2x32xf32> to vector<2xf32>
    %13 = vector.shape_cast %12 : vector<2xf32> to vector<2x1xf32>
    %14 = vector.broadcast %9 : f32 to vector<2x1xf32>
    %15 = arith.addf %13, %14 : vector<2x1xf32>
    %16 = math.tanh %15 : vector<2x1xf32>
    %17 = arith.mulf %16, %16 : vector<2x1xf32>
    %cst_7 = arith.constant 1.000000e+00 : f32
    %18 = vector.broadcast %cst_7 : f32 to vector<2x1xf32>
    %19 = arith.subf %18, %17 : vector<2x1xf32>
    %20 = vector.broadcast %8 : vector<1x1xf32> to vector<2x1xf32>
    %21 = arith.mulf %19, %20 : vector<2x1xf32>
    %cst_8 = arith.constant 1.000000e+00 : f32
    %22 = vector.broadcast %cst_8 : f32 to vector<2x1xf32>
    %23 = arith.addf %22, %21 : vector<2x1xf32>
    %24 = math.absf %23 : vector<2x1xf32>
    %cst_9 = arith.constant 1.000000e-07 : f32
    %25 = vector.broadcast %cst_9 : f32 to vector<2x1xf32>
    %26 = arith.addf %24, %25 : vector<2x1xf32>
    %27 = math.log %26 : vector<2x1xf32>
    %28 = vector.shape_cast %27 : vector<2x1xf32> to vector<2xf32>
    %c0_10 = arith.constant 0 : index
    %c0_11 = arith.constant 0 : index
    %29 = vector.load %arg6[%c0_10, %c0_11] : memref<4x2xf32, #tpu.memory_space<vmem>>, vector<1x2xf32>
    %30 = vector.shape_cast %29 : vector<1x2xf32> to vector<2xf32>
    %31 = vector.shape_cast %28 : vector<2xf32> to vector<1x2xf32>
    tpu.vector_store %arg6[%c0_10, %c0_11], %31 {strides = array<i32>} : memref<4x2xf32, #tpu.memory_space<vmem>>, vector<1x2xf32>,
    %32 = vector.broadcast %7 : vector<1x32xf32> to vector<2x32xf32>
    %33 = vector.broadcast %16 : vector<2x1xf32> to vector<2x32xf32>
    %34 = arith.mulf %32, %33 : vector<2x32xf32>
    %35 = arith.addf %0, %34 : vector<2x32xf32>
    %36 = vector.extract_strided_slice %1 {offsets = [1, 0], sizes = [1, 32], strides = [1, 1]} : vector<4x32xf32> to vector<1x32xf32>
    %37 = vector.extract_strided_slice %2 {offsets = [1, 0], sizes = [1, 32], strides = [1, 1]} : vector<4x32xf32> to vector<1x32xf32>
    %38 = vector.extract_strided_slice %5 {offsets = [1, 0], sizes = [1, 1], strides = [1, 1]} : vector<4x1xf32> to vector<1x1xf32>
    %c1 = arith.constant 1 : index
    %39 = memref.load %arg1[%c1] : memref<4xf32, #tpu.memory_space<smem>>
    %40 = vector.broadcast %36 : vector<1x32xf32> to vector<2x32xf32>
    %41 = arith.mulf %35, %40 : vector<2x32xf32>
    %cst_12 = arith.constant dense<0.000000e+00> : vector<2xf32>
    %42 = vector.multi_reduction <add>, %41, %cst_12 [1] : vector<2x32xf32> to vector<2xf32>
    %43 = vector.shape_cast %42 : vector<2xf32> to vector<2x1xf32>
    %44 = vector.broadcast %39 : f32 to vector<2x1xf32>
    %45 = arith.addf %43, %44 : vector<2x1xf32>
    %46 = math.tanh %45 : vector<2x1xf32>
    %47 = arith.mulf %46, %46 : vector<2x1xf32>
    %cst_13 = arith.constant 1.000000e+00 : f32
    %48 = vector.broadcast %cst_13 : f32 to vector<2x1xf32>
    %49 = arith.subf %48, %47 : vector<2x1xf32>
    %50 = vector.broadcast %38 : vector<1x1xf32> to vector<2x1xf32>
    %51 = arith.mulf %49, %50 : vector<2x1xf32>
    %cst_14 = arith.constant 1.000000e+00 : f32
    %52 = vector.broadcast %cst_14 : f32 to vector<2x1xf32>
    %53 = arith.addf %52, %51 : vector<2x1xf32>
    %54 = math.absf %53 : vector<2x1xf32>
    %cst_15 = arith.constant 1.000000e-07 : f32
    %55 = vector.broadcast %cst_15 : f32 to vector<2x1xf32>
    %56 = arith.addf %54, %55 : vector<2x1xf32>
    %57 = math.log %56 : vector<2x1xf32>
    %58 = vector.shape_cast %57 : vector<2x1xf32> to vector<2xf32>
    %c1_16 = arith.constant 1 : index
    %c0_17 = arith.constant 0 : index
    %59 = vector.load %arg6[%c1_16, %c0_17] : memref<4x2xf32, #tpu.memory_space<vmem>>, vector<1x2xf32>
    %60 = vector.shape_cast %59 : vector<1x2xf32> to vector<2xf32>
    %61 = vector.shape_cast %58 : vector<2xf32> to vector<1x2xf32>
    tpu.vector_store %arg6[%c1_16, %c0_17], %61 {strides = array<i32>} : memref<4x2xf32, #tpu.memory_space<vmem>>, vector<1x2xf32>,
    %62 = vector.broadcast %37 : vector<1x32xf32> to vector<2x32xf32>
    %63 = vector.broadcast %46 : vector<2x1xf32> to vector<2x32xf32>
    %64 = arith.mulf %62, %63 : vector<2x32xf32>
    %65 = arith.addf %35, %64 : vector<2x32xf32>
    %66 = vector.extract_strided_slice %1 {offsets = [2, 0], sizes = [1, 32], strides = [1, 1]} : vector<4x32xf32> to vector<1x32xf32>
    %67 = vector.extract_strided_slice %2 {offsets = [2, 0], sizes = [1, 32], strides = [1, 1]} : vector<4x32xf32> to vector<1x32xf32>
    %68 = vector.extract_strided_slice %5 {offsets = [2, 0], sizes = [1, 1], strides = [1, 1]} : vector<4x1xf32> to vector<1x1xf32>
    %c2 = arith.constant 2 : index
    %69 = memref.load %arg1[%c2] : memref<4xf32, #tpu.memory_space<smem>>
    %70 = vector.broadcast %66 : vector<1x32xf32> to vector<2x32xf32>
    %71 = arith.mulf %65, %70 : vector<2x32xf32>
    %cst_18 = arith.constant dense<0.000000e+00> : vector<2xf32>
    %72 = vector.multi_reduction <add>, %71, %cst_18 [1] : vector<2x32xf32> to vector<2xf32>
    %73 = vector.shape_cast %72 : vector<2xf32> to vector<2x1xf32>
    %74 = vector.broadcast %69 : f32 to vector<2x1xf32>
    %75 = arith.addf %73, %74 : vector<2x1xf32>
    %76 = math.tanh %75 : vector<2x1xf32>
    %77 = arith.mulf %76, %76 : vector<2x1xf32>
    %cst_19 = arith.constant 1.000000e+00 : f32
    %78 = vector.broadcast %cst_19 : f32 to vector<2x1xf32>
    %79 = arith.subf %78, %77 : vector<2x1xf32>
    %80 = vector.broadcast %68 : vector<1x1xf32> to vector<2x1xf32>
    %81 = arith.mulf %79, %80 : vector<2x1xf32>
    %cst_20 = arith.constant 1.000000e+00 : f32
    %82 = vector.broadcast %cst_20 : f32 to vector<2x1xf32>
    %83 = arith.addf %82, %81 : vector<2x1xf32>
    %84 = math.absf %83 : vector<2x1xf32>
    %cst_21 = arith.constant 1.000000e-07 : f32
    %85 = vector.broadcast %cst_21 : f32 to vector<2x1xf32>
    %86 = arith.addf %84, %85 : vector<2x1xf32>
    %87 = math.log %86 : vector<2x1xf32>
    %88 = vector.shape_cast %87 : vector<2x1xf32> to vector<2xf32>
    %c2_22 = arith.constant 2 : index
    %c0_23 = arith.constant 0 : index
    %89 = vector.load %arg6[%c2_22, %c0_23] : memref<4x2xf32, #tpu.memory_space<vmem>>, vector<1x2xf32>
    %90 = vector.shape_cast %89 : vector<1x2xf32> to vector<2xf32>
    %91 = vector.shape_cast %88 : vector<2xf32> to vector<1x2xf32>
    tpu.vector_store %arg6[%c2_22, %c0_23], %91 {strides = array<i32>} : memref<4x2xf32, #tpu.memory_space<vmem>>, vector<1x2xf32>,
    %92 = vector.broadcast %67 : vector<1x32xf32> to vector<2x32xf32>
    %93 = vector.broadcast %76 : vector<2x1xf32> to vector<2x32xf32>
    %94 = arith.mulf %92, %93 : vector<2x32xf32>
    %95 = arith.addf %65, %94 : vector<2x32xf32>
    %96 = vector.extract_strided_slice %1 {offsets = [3, 0], sizes = [1, 32], strides = [1, 1]} : vector<4x32xf32> to vector<1x32xf32>
    %97 = vector.extract_strided_slice %2 {offsets = [3, 0], sizes = [1, 32], strides = [1, 1]} : vector<4x32xf32> to vector<1x32xf32>
    %98 = vector.extract_strided_slice %5 {offsets = [3, 0], sizes = [1, 1], strides = [1, 1]} : vector<4x1xf32> to vector<1x1xf32>
    %c3 = arith.constant 3 : index
    %99 = memref.load %arg1[%c3] : memref<4xf32, #tpu.memory_space<smem>>
    %100 = vector.broadcast %96 : vector<1x32xf32> to vector<2x32xf32>
    %101 = arith.mulf %95, %100 : vector<2x32xf32>
    %cst_24 = arith.constant dense<0.000000e+00> : vector<2xf32>
    %102 = vector.multi_reduction <add>, %101, %cst_24 [1] : vector<2x32xf32> to vector<2xf32>
    %103 = vector.shape_cast %102 : vector<2xf32> to vector<2x1xf32>
    %104 = vector.broadcast %99 : f32 to vector<2x1xf32>
    %105 = arith.addf %103, %104 : vector<2x1xf32>
    %106 = math.tanh %105 : vector<2x1xf32>
    %107 = arith.mulf %106, %106 : vector<2x1xf32>
    %cst_25 = arith.constant 1.000000e+00 : f32
    %108 = vector.broadcast %cst_25 : f32 to vector<2x1xf32>
    %109 = arith.subf %108, %107 : vector<2x1xf32>
    %110 = vector.broadcast %98 : vector<1x1xf32> to vector<2x1xf32>
    %111 = arith.mulf %109, %110 : vector<2x1xf32>
    %cst_26 = arith.constant 1.000000e+00 : f32
    %112 = vector.broadcast %cst_26 : f32 to vector<2x1xf32>
    %113 = arith.addf %112, %111 : vector<2x1xf32>
    %114 = math.absf %113 : vector<2x1xf32>
    %cst_27 = arith.constant 1.000000e-07 : f32
    %115 = vector.broadcast %cst_27 : f32 to vector<2x1xf32>
    %116 = arith.addf %114, %115 : vector<2x1xf32>
    %117 = math.log %116 : vector<2x1xf32>
    %118 = vector.shape_cast %117 : vector<2x1xf32> to vector<2xf32>
    %c3_28 = arith.constant 3 : index
    %c0_29 = arith.constant 0 : index
    %119 = vector.load %arg6[%c3_28, %c0_29] : memref<4x2xf32, #tpu.memory_space<vmem>>, vector<1x2xf32>
    %120 = vector.shape_cast %119 : vector<1x2xf32> to vector<2xf32>
    %121 = vector.shape_cast %118 : vector<2xf32> to vector<1x2xf32>
    tpu.vector_store %arg6[%c3_28, %c0_29], %121 {strides = array<i32>} : memref<4x2xf32, #tpu.memory_space<vmem>>, vector<1x2xf32>,
    %122 = vector.broadcast %97 : vector<1x32xf32> to vector<2x32xf32>
    %123 = vector.broadcast %106 : vector<2x1xf32> to vector<2x32xf32>
    %124 = arith.mulf %122, %123 : vector<2x32xf32>
    %125 = arith.addf %95, %124 : vector<2x32xf32>
    %c0_30 = arith.constant 0 : index
    %c0_31 = arith.constant 0 : index
    %126 = vector.load %arg5[%c0_30, %c0_31] : memref<2x32xf32, #tpu.memory_space<vmem>>, vector<2x32xf32>
    tpu.vector_store %arg5[%c0_30, %c0_31], %125 {strides = array<i32>} : memref<2x32xf32, #tpu.memory_space<vmem>>, vector<2x32xf32>,
    return
  }
  func.func @transform_0(%arg0: i32, %arg1: memref<4xf32, #tpu.memory_space<smem>>) -> (i32, i32) {
    %c0_i32 = arith.constant 0 : i32
    %c0_i32_0 = arith.constant 0 : i32
    return %arg0, %c0_i32 : i32, i32
  }
  func.func @transform_1(%arg0: i32, %arg1: memref<4xf32, #tpu.memory_space<smem>>) -> (i32, i32) {
    %c0_i32 = arith.constant 0 : i32
    %c0_i32_0 = arith.constant 0 : i32
    %c0_i32_1 = arith.constant 0 : i32
    return %c0_i32, %c0_i32_0 : i32, i32
  }
  func.func @transform_2(%arg0: i32, %arg1: memref<4xf32, #tpu.memory_space<smem>>) -> (i32, i32) {
    %c0_i32 = arith.constant 0 : i32
    %c0_i32_0 = arith.constant 0 : i32
    %c0_i32_1 = arith.constant 0 : i32
    return %c0_i32, %c0_i32_0 : i32, i32
  }
  func.func @transform_3(%arg0: i32, %arg1: memref<4xf32, #tpu.memory_space<smem>>) -> (i32, i32) {
    %c0_i32 = arith.constant 0 : i32
    %c0_i32_0 = arith.constant 0 : i32
    return %arg0, %c0_i32 : i32, i32
  }
  func.func @transform_4(%arg0: i32, %arg1: memref<4xf32, #tpu.memory_space<smem>>) -> (i32, i32) {
    %c0_i32 = arith.constant 0 : i32
    %c0_i32_0 = arith.constant 0 : i32
    return %c0_i32, %arg0 : i32, i32
  }
}

</mosaic_0001>

<llo_original>
// kernel: tpu_custom_call.1
$region0: #{tpu_custom_call.1}
  #allocation0 [shape = 'u32[]', space=smem, size = 0x4, offset = 0x4, fixed_abs, tag = 'smem constant byte address 0x4 - core index']
  #allocation1 [shape = 'u32[144,128]{1,0:T(1,128)}', space=vmem, size = 0x12000, scoped, tag = 'internal scratch']
  #allocation2 [shape = 's32[1]{0}', space=sflag, size = 0x4, scoped, tag = 'scoped memory for tpu_custom_call.1']
  #allocation3 [shape = 'u8[512]{0}', space=smem, size = 0x200, scoped, tag = 'prefetched SMEM operand 0']
  %s0 = inlined_call_operand.hbm [shape: f32[4], index: 0, kind: input, shape index: {}]
  %s1 = inlined_call_operand.hbm [shape: f32[2,32], index: 1, kind: input, shape index: {}]
  %s2 = inlined_call_operand.hbm [shape: f32[4,32], index: 2, kind: input, shape index: {}]
  %s3 = inlined_call_operand.vmem [shape: f32[4,32], index: 3, kind: input, shape index: {}]
  %s4 = inlined_call_operand.hbm [shape: f32[2,32], index: 4, kind: output, shape index: {0}]
  %s5 = inlined_call_operand.vmem [shape: f32[4,2], index: 5, kind: output, shape index: {1}]
  %6 = xla_tuple %s4, %s5
  %s7 = sld [smem:[#allocation0]]
  $region38: #{tpu_custom_call.1} parent=0
    _
  %s9 = ssub.s32 1, %s7
  %s10 = scalar_select 0, %s9, %s7
  %12 = dma.hbm_to_smem %s0, 16, [#allocation3], [#allocation2]
  %13 = dma.done [#allocation2], 16
  %14 = sfence
  $region1: #{tpu_custom_call.1} parent=0
    #allocation4 [shape = 'u8[1024]{0}', space=vmem, size = 0x400, scoped, tag = 'input window, operand 1, single buffered']
    #allocation5 [shape = 's32[1]{0}', space=sflag, size = 0x4, scoped, tag = 'scoped memory for tpu_custom_call.1']
    #allocation6 [shape = 's32[1]{0}', space=sflag, size = 0x4, scoped, tag = 'scoped memory for tpu_custom_call.1']
    #allocation7 [shape = 'u8[2048]{0}', space=vmem, size = 0x800, scoped, tag = 'input window, operand 2, single buffered']
    #allocation8 [shape = 's32[1]{0}', space=sflag, size = 0x4, scoped, tag = 'scoped memory for tpu_custom_call.1']
    #allocation9 [shape = 'u8[1024]{0}', space=vmem, size = 0x400, scoped, tag = 'output window, operand 0, single buffered']
    %15 = vsyncpa [#allocation5], 0
    %16 = vsyncpa [#allocation8], 0
    %17 = vsyncpa [#allocation6], 0
    // Predicated region
    $region2: #{tpu_custom_call.1} parent=1 // pred_check
      _
    $region3: #{tpu_custom_call.1} parent=1 // pred_check_branch
      %19 = sbr.rel (0) target = $region5
    $region4: #{tpu_custom_call.1} parent=1 // pred_region
      %s21 = ssub.s32 32, 32
      %22 = vsyncadd [#allocation5], %s21
      %s24 = sshll.u32 [#allocation4], 4
      %s25 = int_to_ptr.vmem [resolvable:$true] %s24
      %27 = dma.hbm_to_vmem [thread:$0]  %s1, 32, %s25, [#allocation5]
    $region5: #{tpu_custom_call.1} parent=1 // pred_fallthru
      _
    // Predicated region
    $region6: #{tpu_custom_call.1} parent=1 // pred_check
      _
    $region7: #{tpu_custom_call.1} parent=1 // pred_check_branch
      %29 = sbr.rel (0) target = $region9
    $region8: #{tpu_custom_call.1} parent=1 // pred_region
      %s31 = ssub.s32 64, 64
      %32 = vsyncadd [#allocation8], %s31
      %s34 = sshll.u32 [#allocation7], 4
      %s35 = int_to_ptr.vmem [resolvable:$true] %s34
      %37 = dma.hbm_to_vmem [thread:$0]  %s2, 64, %s35, [#allocation8]
    $region9: #{tpu_custom_call.1} parent=1 // pred_fallthru
      _
    // Predicated region
    $region10: #{tpu_custom_call.1} parent=1 // pred_check
      _
    $region11: #{tpu_custom_call.1} parent=1 // pred_check_branch
      %39 = sbr.rel (0) target = $region13
    $region12: #{tpu_custom_call.1} parent=1 // pred_region
      _
    $region13: #{tpu_custom_call.1} parent=1 // pred_fallthru
      _
    // Predicated region
    $region14: #{tpu_custom_call.1} parent=1 // pred_check
      _
    $region15: #{tpu_custom_call.1} parent=1 // pred_check_branch
      %41 = sbr.rel (0) target = $region17
    $region16: #{tpu_custom_call.1} parent=1 // pred_region
      %42 = dma.done [#allocation5], 32
    $region17: #{tpu_custom_call.1} parent=1 // pred_fallthru
      _
    // Predicated region
    $region18: #{tpu_custom_call.1} parent=1 // pred_check
      _
    $region19: #{tpu_custom_call.1} parent=1 // pred_check_branch
      %44 = sbr.rel (0) target = $region21
    $region20: #{tpu_custom_call.1} parent=1 // pred_region
      %45 = dma.done [#allocation8], 64
    $region21: #{tpu_custom_call.1} parent=1 // pred_fallthru
      _
    %v46 = vld [vmem:[#allocation4] sm:$0x3]
    %v47 = vld [vmem:[#allocation7] sm:$0xf]
    %v48 = vld [vmem:[%s3] sm:$0xf]
    %v49 = vmul.f32 %v47, %v48
    %vm50 = vcmask 257024
    %v51 = vsel %vm50, %v49, 0.0
    %52 = vadd.xlane.f32.xlu0 %v51
    %v53 = vpop.xlane.xlu0 %52
    %s54 = sld [smem:[#allocation3]]
    %v55 = vlaneseq
    %v56 = vshrl.u32 %v55, 7
    %v57 = vsub.s32 0, %v56
    %v58 = vrot.slane %v47, %v57
    %v59 = vmul.f32 %v46, %v58
    %vm60 = vcmask 254976
    %v61 = vsel %vm60, %v59, 0.0
    %62 = vadd.xlane.f32.xlu0 %v61
    %v63 = vpop.xlane.xlu0 %62
    %v64 = vstv %s54
    %v65 = vadd.f32 %v63, %v64
    %v66 = vtanh.pop %v65
    %v67 = vmul.f32 %v66, %v66
    %v68 = vsub.f32 1.0, %v67
    %v69 = vlaneseq
    %v70 = vshrl.u32 %v69, 7
    %v71 = vsub.s32 0, %v70
    %v72 = vrot.slane %v53, %v71
    %v73 = vmul.f32 %v68, %v72
    %v74 = vadd.f32 %v73, 1.0
    %v75 = vand.u32 2147483647, %v74
    %v76 = vadd.f32 %v75, 1e-07
    %v77 = vlog2.pop %v76
    %v78 = vmul.f32 %v77, 0.6931472
    %v80 = vlaneseq
    %v81 = vand.u32 %v80, 127
    %v82 = vlaneseq
    %v83 = vshrl.u32 %v82, 7
    %v84 = vsub.s32 %v81, %v83
    %v85 = vrot.slane %v78, %v84
    %vm87 = vcmask 8192
    %88 = vst.msk [vmem:[%s5] sm:$0x1] %vm87, %v85
    %v89 = vlaneseq
    %v90 = vshrl.u32 %v89, 7
    %v91 = vsub.s32 0, %v90
    %v92 = vrot.slane %v48, %v91
    %v93 = vmul.f32 %v92, %v66
    %v94 = vadd.f32 %v46, %v93
    %s95 = sld [smem:[#allocation3 + $0x1]]
    %v96 = vlaneseq
    %v97 = vshrl.u32 %v96, 7
    %v98 = vsub.s32 1, %v97
    %v99 = vrot.slane %v47, %v98
    %v100 = vmul.f32 %v94, %v99
    %v101 = vsel %vm60, %v100, 0.0
    %102 = vadd.xlane.f32.xlu0 %v101
    %v103 = vpop.xlane.xlu0 %102
    %v104 = vstv %s95
    %v105 = vadd.f32 %v103, %v104
    %v106 = vtanh.pop %v105
    %v107 = vmul.f32 %v106, %v106
    %v108 = vsub.f32 1.0, %v107
    %v109 = vlaneseq
    %v110 = vshrl.u32 %v109, 7
    %v111 = vsub.s32 1, %v110
    %v112 = vrot.slane %v53, %v111
    %v113 = vmul.f32 %v108, %v112
    %v114 = vadd.f32 %v113, 1.0
    %v115 = vand.u32 2147483647, %v114
    %v116 = vadd.f32 %v115, 1e-07
    %v117 = vlog2.pop %v116
    %v118 = vmul.f32 %v117, 0.6931472
    %v120 = vlaneseq
    %v121 = vshrl.u32 %v120, 7
    %v122 = vsub.s32 %v81, %v121
    %v123 = vrot.slane %v118, %v122
    %125 = vst.msk [vmem:[%s5 + $0x1] sm:$0x1] %vm87, %v123
    %v126 = vlaneseq
    %v127 = vshrl.u32 %v126, 7
    %v128 = vsub.s32 1, %v127
    %v129 = vrot.slane %v48, %v128
    %v130 = vmul.f32 %v129, %v106
    %v131 = vadd.f32 %v94, %v130
    %s132 = sld [smem:[#allocation3 + $0x2]]
    %v133 = vlaneseq
    %v134 = vshrl.u32 %v133, 7
    %v135 = vsub.s32 2, %v134
    %v136 = vrot.slane %v47, %v135
    %v137 = vmul.f32 %v131, %v136
    %v138 = vsel %vm60, %v137, 0.0
    %139 = vadd.xlane.f32.xlu0 %v138
    %v140 = vpop.xlane.xlu0 %139
    %v141 = vstv %s132
    %v142 = vadd.f32 %v140, %v141
    %v143 = vtanh.pop %v142
    %v144 = vmul.f32 %v143, %v143
    %v145 = vsub.f32 1.0, %v144
    %v146 = vlaneseq
    %v147 = vshrl.u32 %v146, 7
    %v148 = vsub.s32 2, %v147
    %v149 = vrot.slane %v53, %v148
    %v150 = vmul.f32 %v145, %v149
    %v151 = vadd.f32 %v150, 1.0
    %v152 = vand.u32 2147483647, %v151
    %v153 = vadd.f32 %v152, 1e-07
    %v154 = vlog2.pop %v153
    %v155 = vmul.f32 %v154, 0.6931472
    %v157 = vlaneseq
    %v158 = vshrl.u32 %v157, 7
    %v159 = vsub.s32 %v81, %v158
    %v160 = vrot.slane %v155, %v159
    %162 = vst.msk [vmem:[%s5 + $0x2] sm:$0x1] %vm87, %v160
    %v163 = vlaneseq
    %v164 = vshrl.u32 %v163, 7
    %v165 = vsub.s32 2, %v164
    %v166 = vrot.slane %v48, %v165
    %v167 = vmul.f32 %v166, %v143
    %v168 = vadd.f32 %v131, %v167
    %s169 = sld [smem:[#allocation3 + $0x3]]
    %v170 = vlaneseq
    %v171 = vshrl.u32 %v170, 7
    %v172 = vsub.s32 3, %v171
    %v173 = vrot.slane %v47, %v172
    %v174 = vmul.f32 %v168, %v173
    %v175 = vsel %vm60, %v174, 0.0
    %176 = vadd.xlane.f32.xlu0 %v175
    %v177 = vpop.xlane.xlu0 %176
    %v178 = vstv %s169
    %v179 = vadd.f32 %v177, %v178
    %v180 = vtanh.pop %v179
    %v181 = vmul.f32 %v180, %v180
    %v182 = vsub.f32 1.0, %v181
    %v183 = vlaneseq
    %v184 = vshrl.u32 %v183, 7
    %v185 = vsub.s32 3, %v184
    %v186 = vrot.slane %v53, %v185
    %v187 = vmul.f32 %v182, %v186
    %v188 = vadd.f32 %v187, 1.0
    %v189 = vand.u32 2147483647, %v188
    %v190 = vadd.f32 %v189, 1e-07
    %v191 = vlog2.pop %v190
    %v192 = vmul.f32 %v191, 0.6931472
    %v194 = vlaneseq
    %v195 = vshrl.u32 %v194, 7
    %v196 = vsub.s32 %v81, %v195
    %v197 = vrot.slane %v192, %v196
    %199 = vst.msk [vmem:[%s5 + $0x3] sm:$0x1] %vm87, %v197
    %v200 = vlaneseq
    %v201 = vshrl.u32 %v200, 7
    %v202 = vsub.s32 3, %v201
    %v203 = vrot.slane %v48, %v202
    %v204 = vmul.f32 %v203, %v180
    %v205 = vadd.f32 %v168, %v204
    %206 = vst.msk [vmem:[#allocation9] sm:$0x3] %vm60, %v205
    // Predicated region
    $region22: #{tpu_custom_call.1} parent=1 // pred_check
      _
    $region23: #{tpu_custom_call.1} parent=1 // pred_check_branch
      %208 = sbr.rel (0) target = $region25
    $region24: #{tpu_custom_call.1} parent=1 // pred_region
      %s210 = ssub.s32 32, 32
      %211 = vsyncadd [#allocation6], %s210
      %s213 = sshll.u32 [#allocation9], 4
      %s214 = int_to_ptr.vmem [resolvable:$true] %s213
      %216 = dma.vmem_to_hbm [thread:$0]  %s214, 32, %s4, [#allocation6]
    $region25: #{tpu_custom_call.1} parent=1 // pred_fallthru
      _
    // Predicated region
    $region26: #{tpu_custom_call.1} parent=1 // pred_check
      _
    $region27: #{tpu_custom_call.1} parent=1 // pred_check_branch
      %218 = sbr.rel (0) target = $region29
    $region28: #{tpu_custom_call.1} parent=1 // pred_region
      _
    $region29: #{tpu_custom_call.1} parent=1 // pred_fallthru
      _
    // Predicated region
    $region30: #{tpu_custom_call.1} parent=1 // pred_check
      _
    $region31: #{tpu_custom_call.1} parent=1 // pred_check_branch
      %220 = sbr.rel (0) target = $region33
    $region32: #{tpu_custom_call.1} parent=1 // pred_region
      %221 = dma.done [#allocation6], 32
    $region33: #{tpu_custom_call.1} parent=1 // pred_fallthru
      _
    // Predicated region
    $region34: #{tpu_custom_call.1} parent=1 // pred_check
      _
    $region35: #{tpu_custom_call.1} parent=1 // pred_check_branch
      %223 = sbr.rel (0) target = $region37
    $region36: #{tpu_custom_call.1} parent=1 // pred_region
      _
    $region37: #{tpu_custom_call.1} parent=1 // pred_fallthru
      _
    %224 = vsyncpa [#allocation5], 1
    %225 = vsyncpa [#allocation8], 1
    %226 = vsyncpa [#allocation6], 1

</llo_original>
